<compile_context>
chip_gen: v7x
topology: tpu7x:2x2x1
jax: 0.10.0
libtpu: 0.0.40
codegen_flags: <defaults>
</compile_context>

<pallas_src>
import jax
import jax.numpy as jnp
from jax.experimental import pallas as pl
from jax.experimental.pallas import tpu as pltpu


def _round_up(v, m):
    return ((v + m - 1) // m) * m


def _last_linear_kernel(x_ref, w1_ref, b1_ref, w2_ref, b2_ref, out_ref):
    # x_ref : (TM, F)      bf16  (cast in wrapper)
    # w1_ref: (F,  H)      bf16  (BN scale already folded in)
    # b1_ref: (1,  H)      f32   (linear bias + BN shift, folded)
    # w2_ref: (H,  O_pad)  bf16  (zero-padded to a multiple of 128 lanes)
    # b2_ref: (1,  O_pad)  f32
    # out_ref: (TM, O_pad) f32 or bf16
    # Linear 1 (+ folded BatchNorm1d) -> ReLU.  Dropout is identity in eval mode.
    h = jnp.dot(x_ref[...], w1_ref[...], preferred_element_type=jnp.float32)
    h = jnp.maximum(h + b1_ref[...], 0.0)

    # Linear 2.
    out = jnp.dot(h.astype(jnp.bfloat16), w2_ref[...],
                  preferred_element_type=jnp.float32)
    out_ref[...] = (out + b2_ref[...]).astype(out_ref.dtype)


def last_linear(x, params, *, eps=1e-5, block_m=512, out_dtype=jnp.float32):
    """params = (w1, b1, gamma, beta, running_mean, running_var, w2, b2).

    w1: (in_features, hidden), w2: (hidden, 80); biases / BN stats are 1-D.
    Returns (N, 80) in `out_dtype`, matching LastLinear.forward in eval mode.
    """
    w1, b1, gamma, beta, mean, var, w2, b2 = params
    N, F = x.shape
    H = w1.shape[1]
    O = w2.shape[1]

    # ---- fold BatchNorm1d (inference) into the first Linear -----------------
    s = gamma / jnp.sqrt(var + eps)                                  # (H,)
    w1f = (w1 * s[None, :]).astype(jnp.bfloat16)                     # (F, H)
    b1f = ((b1 - mean) * s + beta).reshape(1, H).astype(jnp.float32)

    # ---- lane-dense second matmul: pad out_features up to a multiple of 128 -
    o_pad = _round_up(O, 128)
    w2p = jnp.zeros((H, o_pad), jnp.float32).at[:, :O].set(w2).astype(jnp.bfloat16)
    b2p = jnp.zeros((1, o_pad), jnp.float32).at[0, :O].set(b2)

    # ---- bf16 input stream (halves HBM read); numerics unchanged (MXU is bf16)
    xb = x.astype(jnp.bfloat16)

    # ---- batch tile: multiple of 16 (bf16 sublanes), no padded copy of x -----
    bm = min(block_m, _round_up(N, 16))
    # v7x: ensure >= 2 "parallel" grid steps so both TensorCores get work.
    if pl.cdiv(N, bm) < 2 and N > 16:
        bm = _round_up(pl.cdiv(N, 2), 16)
    grid = (pl.cdiv(N, bm),)   # ragged last block handled by Pallas boundary logic

    out_itemsize = jnp.dtype(out_dtype).itemsize

    # ---- explicit VMEM budget (v7x: 64 MiB per TC, 32 MiB scoped default) ----
    vmem_est = (
        2 * bm * F * 2                      # x tile, bf16, double-buffered
        + 2 * bm * o_pad * out_itemsize     # out tile, double-buffered
        + 2 * 2 * (F * H + H * o_pad)       # resident bf16 weights (2 buffers)
        + 2 * 4 * (H + o_pad)               # biases
        + 4 * bm * (H + o_pad)              # f32 h / accumulator intermediates
    )
    vmem_limit = int(min(max(2 * vmem_est, 16 << 20), 48 << 20))
    # NOTE: if the resident weights ever grow, single-buffer them via
    # pipeline_mode=pl.Buffered(1) on the w1/w2 specs to free VMEM for bm.

    flops = 2 * N * (F * H + H * o_pad)
    bytes_accessed = (N * F * 2                     # x (bf16)
                      + N * o_pad * out_itemsize    # out
                      + 2 * (F * H + H * o_pad)     # bf16 weights
                      + 4 * (H + o_pad))            # f32 biases

    out = pl.pallas_call(
        _last_linear_kernel,
        out_shape=jax.ShapeDtypeStruct((N, o_pad), out_dtype),
        grid_spec=pltpu.PrefetchScalarGridSpec(
            num_scalar_prefetch=0,
            grid=grid,
            in_specs=[
                pl.BlockSpec((bm, F), lambda i: (i, 0)),        # x rows (bf16)
                pl.BlockSpec((F, H), lambda i: (0, 0)),         # w1 (resident)
                pl.BlockSpec((1, H), lambda i: (0, 0)),         # b1
                pl.BlockSpec((H, o_pad), lambda i: (0, 0)),     # w2 (resident)
                pl.BlockSpec((1, o_pad), lambda i: (0, 0)),     # b2
            ],
            out_specs=pl.BlockSpec((bm, o_pad), lambda i: (i, 0)),
        ),
        compiler_params=pltpu.CompilerParams(
            dimension_semantics=("parallel",),
            vmem_limit_bytes=vmem_limit),
        cost_estimate=pl.CostEstimate(
            flops=flops, transcendentals=0, bytes_accessed=bytes_accessed),
    )(xb, w1f, b1f, w2p, b2p)

    # Only the (necessary) lane slice remains; no row padding / row slice.
    return out[:, :O]


def reference(x, params, eps=1e-5):
    """Pure-JAX f32 reference of LastLinear.forward (eval mode)."""
    w1, b1, gamma, beta, mean, var, w2, b2 = params
    hi = jax.lax.Precision.HIGHEST
    h = jnp.dot(x, w1, precision=hi) + b1
    h = (h - mean) / jnp.sqrt(var + eps) * gamma + beta     # BatchNorm1d (eval)
    h = jnp.maximum(h, 0.0)                                 # Dropout(eval)=id, ReLU
    return jnp.dot(h, w2, precision=hi) + b2


def make_params(key, in_features, hidden_size, out_features):
    keys = jax.random.split(key, 8)
    w1 = jax.random.normal(keys[0], (in_features, hidden_size), jnp.float32) / jnp.sqrt(in_features)
    b1 = jax.random.normal(keys[1], (hidden_size,), jnp.float32) * 0.1
    gamma = jax.random.uniform(keys[2], (hidden_size,), jnp.float32, 0.5, 1.5)
    beta = jax.random.normal(keys[3], (hidden_size,), jnp.float32) * 0.1
    mean = jax.random.normal(keys[4], (hidden_size,), jnp.float32) * 0.1
    var = jax.random.uniform(keys[5], (hidden_size,), jnp.float32, 0.5, 1.5)
    w2 = jax.random.normal(keys[6], (hidden_size, out_features), jnp.float32) / jnp.sqrt(hidden_size)
    b2 = jax.random.normal(keys[7], (out_features,), jnp.float32) * 0.1
    return (w1, b1, gamma, beta, mean, var, w2, b2)


if __name__ == "__main__":
    # LastLinear(in_features=64, hidden_size=256) -> output dim 80.
    in_features, hidden_size, out_features = 64, 256, 80
    key = jax.random.PRNGKey(0)
    kx, kp, kx2 = jax.random.split(key, 3)
    params = make_params(kp, in_features, hidden_size, out_features)

    # Case 1: small batch (single grid step), N = 16.
    N = 16
    x = jax.random.normal(kx, (N, in_features), jnp.float32)
    out = last_linear(x, params)
    jax.block_until_ready(out)
    ref = reference(x, params)
    assert out.shape == (N, out_features)
    # bf16 MXU operands with f32 accumulation vs. HIGHEST-precision f32 reference.
    assert jnp.allclose(out, ref, rtol=5e-2, atol=5e-2), float(jnp.max(jnp.abs(out - ref)))

    # Case 2: ragged multi-step grid (exercises boundary blocks + 2 parallel steps).
    N2 = 100
    x2 = jax.random.normal(kx2, (N2, in_features), jnp.float32)
    out2 = last_linear(x2, params, block_m=32)
    jax.block_until_ready(out2)
    ref2 = reference(x2, params)
    assert out2.shape == (N2, out_features)
    assert jnp.allclose(out2, ref2, rtol=5e-2, atol=5e-2), float(jnp.max(jnp.abs(out2 - ref2)))

    print("KERNEL_OK")
</pallas_src>

<mosaic_0001>
module attributes {stable_mosaic.version = 11 : i64} {
  func.func @_last_linear_kernel(%arg0: i32, %arg1: memref<16x64xbf16, #tpu.memory_space<vmem>>, %arg2: memref<64x256xbf16, #tpu.memory_space<vmem>>, %arg3: memref<1x256xf32, #tpu.memory_space<vmem>>, %arg4: memref<256x128xbf16, #tpu.memory_space<vmem>>, %arg5: memref<1x128xf32, #tpu.memory_space<vmem>>, %arg6: memref<16x128xf32, #tpu.memory_space<vmem>>) attributes {dimension_semantics = [#tpu.dimension_semantics<parallel>], iteration_bounds = array<i64: 1>, scalar_prefetch = 0 : i64, scratch_operands = 0 : i64, tpu.core_type = #tpu.core_type<tc>, window_params = [{transform_indices = @transform_0, window_bounds = array<i64: 16, 64>}, {pipeline_mode = #tpu.pipeline_mode<synchronous>, transform_indices = @transform_1, window_bounds = array<i64: 64, 256>}, {pipeline_mode = #tpu.pipeline_mode<synchronous>, transform_indices = @transform_2, window_bounds = array<i64: 1, 256>}, {pipeline_mode = #tpu.pipeline_mode<synchronous>, transform_indices = @transform_3, window_bounds = array<i64: 256, 128>}, {pipeline_mode = #tpu.pipeline_mode<synchronous>, transform_indices = @transform_4, window_bounds = array<i64: 1, 128>}, {transform_indices = @transform_5, window_bounds = array<i64: 16, 128>}]} {
    %c0 = arith.constant 0 : index
    %c0_0 = arith.constant 0 : index
    %0 = vector.load %arg1[%c0, %c0_0] : memref<16x64xbf16, #tpu.memory_space<vmem>>, vector<16x64xbf16>
    %c0_1 = arith.constant 0 : index
    %c0_2 = arith.constant 0 : index
    %1 = vector.load %arg2[%c0_1, %c0_2] : memref<64x256xbf16, #tpu.memory_space<vmem>>, vector<64x256xbf16>
    %cst = arith.constant dense<0.000000e+00> : vector<16x256xf32>
    %2 = tpu.matmul %0, %1, %cst {dimension_numbers = #tpu.dot_dimension_numbers<[1], [0], [0], [1], [0, 0, 1, 1], [], []>} : vector<16x64xbf16>, vector<64x256xbf16>, vector<16x256xf32> -> vector<16x256xf32>
    %c0_3 = arith.constant 0 : index
    %c0_4 = arith.constant 0 : index
    %3 = vector.load %arg3[%c0_3, %c0_4] : memref<1x256xf32, #tpu.memory_space<vmem>>, vector<1x256xf32>
    %4 = vector.broadcast %3 : vector<1x256xf32> to vector<16x256xf32>
    %5 = arith.addf %2, %4 : vector<16x256xf32>
    %cst_5 = arith.constant 0.000000e+00 : f32
    %6 = vector.broadcast %cst_5 : f32 to vector<16x256xf32>
    %7 = arith.maximumf %5, %6 : vector<16x256xf32>
    %8 = arith.truncf %7 : vector<16x256xf32> to vector<16x256xbf16>
    %c0_6 = arith.constant 0 : index
    %c0_7 = arith.constant 0 : index
    %9 = vector.load %arg4[%c0_6, %c0_7] : memref<256x128xbf16, #tpu.memory_space<vmem>>, vector<256x128xbf16>
    %cst_8 = arith.constant dense<0.000000e+00> : vector<16x128xf32>
    %10 = tpu.matmul %8, %9, %cst_8 {dimension_numbers = #tpu.dot_dimension_numbers<[1], [0], [0], [1], [0, 0, 1, 1], [], []>} : vector<16x256xbf16>, vector<256x128xbf16>, vector<16x128xf32> -> vector<16x128xf32>
    %c0_9 = arith.constant 0 : index
    %c0_10 = arith.constant 0 : index
    %11 = vector.load %arg5[%c0_9, %c0_10] : memref<1x128xf32, #tpu.memory_space<vmem>>, vector<1x128xf32>
    %12 = vector.broadcast %11 : vector<1x128xf32> to vector<16x128xf32>
    %13 = arith.addf %10, %12 : vector<16x128xf32>
    %c0_11 = arith.constant 0 : index
    %c0_12 = arith.constant 0 : index
    %14 = vector.load %arg6[%c0_11, %c0_12] : memref<16x128xf32, #tpu.memory_space<vmem>>, vector<16x128xf32>
    tpu.vector_store %arg6[%c0_11, %c0_12], %13 {strides = array<i32>} : memref<16x128xf32, #tpu.memory_space<vmem>>, vector<16x128xf32>,
    return
  }
  func.func @transform_0(%arg0: i32) -> (i32, i32) {
    %c0_i32 = arith.constant 0 : i32
    %c0_i32_0 = arith.constant 0 : i32
    return %arg0, %c0_i32 : i32, i32
  }
  func.func @transform_1(%arg0: i32) -> (i32, i32) {
    %c0_i32 = arith.constant 0 : i32
    %c0_i32_0 = arith.constant 0 : i32
    %c0_i32_1 = arith.constant 0 : i32
    return %c0_i32, %c0_i32_0 : i32, i32
  }
  func.func @transform_2(%arg0: i32) -> (i32, i32) {
    %c0_i32 = arith.constant 0 : i32
    %c0_i32_0 = arith.constant 0 : i32
    %c0_i32_1 = arith.constant 0 : i32
    return %c0_i32, %c0_i32_0 : i32, i32
  }
  func.func @transform_3(%arg0: i32) -> (i32, i32) {
    %c0_i32 = arith.constant 0 : i32
    %c0_i32_0 = arith.constant 0 : i32
    %c0_i32_1 = arith.constant 0 : i32
    return %c0_i32, %c0_i32_0 : i32, i32
  }
  func.func @transform_4(%arg0: i32) -> (i32, i32) {
    %c0_i32 = arith.constant 0 : i32
    %c0_i32_0 = arith.constant 0 : i32
    %c0_i32_1 = arith.constant 0 : i32
    return %c0_i32, %c0_i32_0 : i32, i32
  }
  func.func @transform_5(%arg0: i32) -> (i32, i32) {
    %c0_i32 = arith.constant 0 : i32
    %c0_i32_0 = arith.constant 0 : i32
    return %arg0, %c0_i32 : i32, i32
  }
}

</mosaic_0001>

<llo_original>
// kernel: tpu_custom_call.1
$region0: #{tpu_custom_call.1}
  #allocation0 [shape = 'u32[]', space=smem, size = 0x4, offset = 0x4, fixed_abs, tag = 'smem constant byte address 0x4 - core index']
  #allocation1 [shape = 'u32[144,128]{1,0:T(1,128)}', space=vmem, size = 0x12000, scoped, tag = 'internal scratch']
  %s0 = inlined_call_operand.hbm [shape: bf16[16,64], index: 0, kind: input, shape index: {}]
  %s1 = inlined_call_operand.hbm [shape: bf16[64,256], index: 1, kind: input, shape index: {}]
  %s2 = inlined_call_operand.vmem [shape: f32[1,256], index: 2, kind: input, shape index: {}]
  %s3 = inlined_call_operand.hbm [shape: bf16[256,128], index: 3, kind: input, shape index: {}]
  %s4 = inlined_call_operand.vmem [shape: f32[1,128], index: 4, kind: input, shape index: {}]
  %s5 = inlined_call_operand.hbm [shape: f32[16,128], index: 5, kind: output, shape index: {}]
  %s6 = sld [smem:[#allocation0]]
  $region42: #{tpu_custom_call.1} parent=0
    _
  %s8 = ssub.s32 1, %s6
  %s9 = scalar_select 0, %s8, %s6
  $region1: #{tpu_custom_call.1} parent=0
    #allocation2 [shape = 'u8[4096]{0}', space=vmem, size = 0x1000, scoped, tag = 'input window, operand 0, single buffered']
    #allocation3 [shape = 's32[1]{0}', space=sflag, size = 0x4, scoped, tag = 'scoped memory for tpu_custom_call.1']
    #allocation4 [shape = 's32[1]{0}', space=sflag, size = 0x4, scoped, tag = 'scoped memory for tpu_custom_call.1']
    #allocation5 [shape = 'u8[32768]{0}', space=vmem, size = 0x8000, scoped, tag = 'input window, operand 1, single buffered']
    #allocation6 [shape = 's32[1]{0}', space=sflag, size = 0x4, scoped, tag = 'scoped memory for tpu_custom_call.1']
    #allocation7 [shape = 'u8[65536]{0}', space=vmem, size = 0x10000, scoped, tag = 'input window, operand 3, single buffered']
    #allocation8 [shape = 'u8[8192]{0}', space=vmem, size = 0x2000, scoped, tag = 'output window, operand 0, single buffered']
    %10 = vsyncpa [#allocation3], 0
    %11 = vsyncpa [#allocation6], 0
    %12 = vsyncpa [#allocation4], 0
    // Predicated region
    $region2: #{tpu_custom_call.1} parent=1 // pred_check
      _
    $region3: #{tpu_custom_call.1} parent=1 // pred_check_branch
      %14 = sbr.rel (0) target = $region5
    $region4: #{tpu_custom_call.1} parent=1 // pred_region
      %s16 = ssub.s32 128, 128
      %17 = vsyncadd [#allocation3], %s16
      %s18 = sshll.u32 [#allocation2], 4
      %s19 = int_to_ptr.vmem [resolvable:$true] %s18
      %24 = dma.hbm_to_vmem [thread:$0]  %s0, 128, %s19, [#allocation3], 64, 64, 4
    $region5: #{tpu_custom_call.1} parent=1 // pred_fallthru
      _
    // Predicated region
    $region6: #{tpu_custom_call.1} parent=1 // pred_check
      _
    $region7: #{tpu_custom_call.1} parent=1 // pred_check_branch
      %26 = sbr.rel (0) target = $region9
    $region8: #{tpu_custom_call.1} parent=1 // pred_region
      %s28 = ssub.s32 1024, 1024
      %29 = vsyncadd [#allocation6], %s28
      %s30 = sshll.u32 [#allocation5], 4
      %s31 = int_to_ptr.vmem [resolvable:$true] %s30
      %36 = dma.hbm_to_vmem [thread:$0]  %s1, 1024, %s31, [#allocation6], 128, 128, 8
    $region9: #{tpu_custom_call.1} parent=1 // pred_fallthru
      _
    // Predicated region
    $region10: #{tpu_custom_call.1} parent=1 // pred_check
      _
    $region11: #{tpu_custom_call.1} parent=1 // pred_check_branch
      %38 = sbr.rel (0) target = $region13
    $region12: #{tpu_custom_call.1} parent=1 // pred_region
      _
    $region13: #{tpu_custom_call.1} parent=1 // pred_fallthru
      _
    // Predicated region
    $region14: #{tpu_custom_call.1} parent=1 // pred_check
      _
    $region15: #{tpu_custom_call.1} parent=1 // pred_check_branch
      %40 = sbr.rel (0) target = $region17
    $region16: #{tpu_custom_call.1} parent=1 // pred_region
      %s42 = ssub.s32 2048, 2048
      %43 = vsyncadd [#allocation6], %s42
      %s44 = sshll.u32 [#allocation7], 4
      %s45 = int_to_ptr.vmem [resolvable:$true] %s44
      %50 = dma.hbm_to_vmem [thread:$0]  %s3, 2048, %s45, [#allocation6], 64, 64, 4
    $region17: #{tpu_custom_call.1} parent=1 // pred_fallthru
      _
    // Predicated region
    $region18: #{tpu_custom_call.1} parent=1 // pred_check
      _
    $region19: #{tpu_custom_call.1} parent=1 // pred_check_branch
      %52 = sbr.rel (0) target = $region21
    $region20: #{tpu_custom_call.1} parent=1 // pred_region
      _
    $region21: #{tpu_custom_call.1} parent=1 // pred_fallthru
      _
    // Predicated region
    $region22: #{tpu_custom_call.1} parent=1 // pred_check
      _
    $region23: #{tpu_custom_call.1} parent=1 // pred_check_branch
      %54 = sbr.rel (0) target = $region25
    $region24: #{tpu_custom_call.1} parent=1 // pred_region
      %55 = dma.done [#allocation3], 128
    $region25: #{tpu_custom_call.1} parent=1 // pred_fallthru
      _
    // Predicated region
    $region26: #{tpu_custom_call.1} parent=1 // pred_check
      _
    $region27: #{tpu_custom_call.1} parent=1 // pred_check_branch
      %57 = sbr.rel (0) target = $region29
    $region28: #{tpu_custom_call.1} parent=1 // pred_region
      %58 = dma.done [#allocation6], 1024
    $region29: #{tpu_custom_call.1} parent=1 // pred_fallthru
      _
    // Predicated region
    $region30: #{tpu_custom_call.1} parent=1 // pred_check
      _
    $region31: #{tpu_custom_call.1} parent=1 // pred_check_branch
      %60 = sbr.rel (0) target = $region33
    $region32: #{tpu_custom_call.1} parent=1 // pred_region
      %61 = dma.done [#allocation6], 2048
    $region33: #{tpu_custom_call.1} parent=1 // pred_fallthru
      _
    %v63 = vld [vmem:[#allocation2] sm:$0xf]
    %v64 = vld [vmem:[#allocation2 + $0x4] sm:$0xf]
    %v65 = vld [vmem:[#allocation5] sm:$0xff]
    %v66 = vld [vmem:[#allocation5 + $0x8] sm:$0xff]
    %v67 = vld [vmem:[#allocation5 + $0x10] sm:$0xff]
    %v68 = vld [vmem:[#allocation5 + $0x18] sm:$0xff]
    %v69 = vld [vmem:[#allocation5 + $0x20] sm:$0xff]
    %v70 = vld [vmem:[#allocation5 + $0x28] sm:$0xff]
    %v71 = vld [vmem:[#allocation5 + $0x30] sm:$0xff]
    %v72 = vld [vmem:[#allocation5 + $0x38] sm:$0xff]
    %v73 = vld [vmem:[%s2] sm:$0x3]
    %v75 = vlaneseq
    %v76 = vshrl.u32 %v75, 7
    %v77 = vsub.s32 0, %v76
    %v78 = vrot.slane %v73, %v77
    %v79 = vlaneseq
    %v80 = vshrl.u32 %v79, 7
    %v81 = vsub.s32 1, %v80
    %v82 = vrot.slane %v73, %v81
    %v87 = vunpack.c.l.b16 %v63
    %v88 = vunpack.c.l.b16 %v64
    %v89 = vpack.c.b16 %v88, %v87
    %v98 = vunpack.c.l.b16 %v65
    %v99 = vunpack.c.h.b16 %v65
    %v100 = vunpack.c.l.b16 %v66
    %v101 = vunpack.c.h.b16 %v66
    %v102 = vunpack.c.l.b16 %v67
    %v103 = vunpack.c.h.b16 %v67
    %v104 = vunpack.c.l.b16 %v68
    %v105 = vunpack.c.h.b16 %v68
    %v106 = vunpack.c.l.b16 %v69
    %v107 = vunpack.c.h.b16 %v69
    %v108 = vunpack.c.l.b16 %v70
    %v109 = vunpack.c.h.b16 %v70
    %v110 = vunpack.c.l.b16 %v71
    %v111 = vunpack.c.h.b16 %v71
    %v112 = vunpack.c.l.b16 %v72
    %v113 = vunpack.c.h.b16 %v72
    %v114 = vpack.c.b16 %v100, %v98
    %v115 = vpack.c.b16 %v101, %v99
    %v116 = vpack.c.b16 %v104, %v102
    %v117 = vpack.c.b16 %v105, %v103
    %v118 = vpack.c.b16 %v108, %v106
    %v119 = vpack.c.b16 %v109, %v107
    %v120 = vpack.c.b16 %v112, %v110
    %v121 = vpack.c.b16 %v113, %v111
    %vm130 = vcmask 523264
    %v132 = vsel %vm130, %v89, 0
    %134 = vmatprep.subr.bf16.mxu0 %v115
    %135 = vmatpush1.bf16.msra.mxu0 %v114
    %136 = vmatprep.subr.bf16.mxu0 %v117
    %137 = vmatpush1.bf16.msra.mxu0 %v116
    %138 = vmatprep.subr.bf16.mxu0 %v119
    %139 = vmatpush1.bf16.msra.mxu0 %v118
    %140 = vmatprep.subr.bf16.mxu0 %v121
    %141 = vmatpush1.bf16.msra.mxu0 %v120
    %142 = vmatprep.subr.bf16.mxu0 0
    %143 = vmatpush1.bf16.msra.mxu0 0
    %144 = vmatprep.subr.bf16.mxu0 0
    %145 = vmatpush1.bf16.msra.mxu0 0
    %146 = vmatprep.subr.bf16.mxu0 0
    %147 = vmatpush1.bf16.msra.mxu0 0
    %148 = vmatprep.subr.bf16.mxu0 0
    %149 = vmatpush1.bf16.msra.mxu0 0
    %150 = vmatprep.subr.bf16.mxu0 0
    %151 = vmatpush1.bf16.msra.mxu0 0
    %152 = vmatprep.subr.bf16.mxu0 0
    %153 = vmatpush1.bf16.msra.mxu0 0
    %154 = vmatprep.subr.bf16.mxu0 0
    %155 = vmatpush1.bf16.msra.mxu0 0
    %156 = vmatprep.subr.bf16.mxu0 0
    %157 = vmatpush1.bf16.msra.mxu0 0
    %158 = vmatprep.subr.bf16.mxu0 0
    %159 = vmatpush1.bf16.msra.mxu0 0
    %160 = vmatprep.subr.bf16.mxu0 0
    %161 = vmatpush1.bf16.msra.mxu0 0
    %162 = vmatprep.subr.bf16.mxu0 0
    %163 = vmatpush1.bf16.msra.mxu0 0
    %164 = vmatprep.subr.bf16.mxu0 0
    %165 = vmatpush1.bf16.msra.mxu0 0
    %166 = vmatprep.mubr.bf16.mxu0 0
    %167 = vmatmul.mubr.bf16.gmra.mrb[0].mxu0 %v132
    %v168 = vpop.f32.mrb[0].mxu0
    %v169 = vadd.f32 %v78, %v168
    %v170 = vpop.f32.mrb[0].mxu0
    %v171 = vadd.f32 %v82, %v170
    %v172 = vpop.f32.mrb[0].mxu0
    %v173 = vadd.f32 %v78, %v172
    %v174 = vpop.f32.mrb[0].mxu0
    %v175 = vadd.f32 %v82, %v174
    %176 = vdwg.mxu0
    %v177 = vmax.f32 %v169, 0.0
    %v178 = vmax.f32 %v171, 0.0
    %v179 = vmax.f32 %v173, 0.0
    %v180 = vmax.f32 %v175, 0.0
    %v181 = vpack.c.bf16 %v179, %v177
    %v182 = vpack.c.bf16 %v180, %v178
    %v183 = vld [vmem:[#allocation7] sm:$0xf]
    %v184 = vld [vmem:[#allocation7 + $0x4] sm:$0xf]
    %v185 = vld [vmem:[#allocation7 + $0x8] sm:$0xf]
    %v186 = vld [vmem:[#allocation7 + $0xc] sm:$0xf]
    %v187 = vld [vmem:[#allocation7 + $0x10] sm:$0xf]
    %v188 = vld [vmem:[#allocation7 + $0x14] sm:$0xf]
    %v189 = vld [vmem:[#allocation7 + $0x18] sm:$0xf]
    %v190 = vld [vmem:[#allocation7 + $0x1c] sm:$0xf]
    %v191 = vld [vmem:[#allocation7 + $0x20] sm:$0xf]
    %v192 = vld [vmem:[#allocation7 + $0x24] sm:$0xf]
    %v193 = vld [vmem:[#allocation7 + $0x28] sm:$0xf]
    %v194 = vld [vmem:[#allocation7 + $0x2c] sm:$0xf]
    %v195 = vld [vmem:[#allocation7 + $0x30] sm:$0xf]
    %v196 = vld [vmem:[#allocation7 + $0x34] sm:$0xf]
    %v197 = vld [vmem:[#allocation7 + $0x38] sm:$0xf]
    %v198 = vld [vmem:[#allocation7 + $0x3c] sm:$0xf]
    %v199 = vld [vmem:[#allocation7 + $0x40] sm:$0xf]
    %v200 = vld [vmem:[#allocation7 + $0x44] sm:$0xf]
    %v201 = vld [vmem:[#allocation7 + $0x48] sm:$0xf]
    %v202 = vld [vmem:[#allocation7 + $0x4c] sm:$0xf]
    %v203 = vld [vmem:[#allocation7 + $0x50] sm:$0xf]
    %v204 = vld [vmem:[#allocation7 + $0x54] sm:$0xf]
    %v205 = vld [vmem:[#allocation7 + $0x58] sm:$0xf]
    %v206 = vld [vmem:[#allocation7 + $0x5c] sm:$0xf]
    %v207 = vld [vmem:[#allocation7 + $0x60] sm:$0xf]
    %v208 = vld [vmem:[#allocation7 + $0x64] sm:$0xf]
    %v209 = vld [vmem:[#allocation7 + $0x68] sm:$0xf]
    %v210 = vld [vmem:[#allocation7 + $0x6c] sm:$0xf]
    %v211 = vld [vmem:[#allocation7 + $0x70] sm:$0xf]
    %v212 = vld [vmem:[#allocation7 + $0x74] sm:$0xf]
    %v213 = vld [vmem:[#allocation7 + $0x78] sm:$0xf]
    %v214 = vld [vmem:[#allocation7 + $0x7c] sm:$0xf]
    %v215 = vld [vmem:[%s4] sm:$0x1]
    %v217 = vlaneseq
    %v218 = vshrl.u32 %v217, 7
    %v219 = vsub.s32 0, %v218
    %v220 = vrot.slane %v215, %v219
    %v254 = vunpack.c.l.b16 %v183
    %v255 = vunpack.c.l.b16 %v184
    %v256 = vunpack.c.l.b16 %v185
    %v257 = vunpack.c.l.b16 %v186
    %v258 = vunpack.c.l.b16 %v187
    %v259 = vunpack.c.l.b16 %v188
    %v260 = vunpack.c.l.b16 %v189
    %v261 = vunpack.c.l.b16 %v190
    %v262 = vunpack.c.l.b16 %v191
    %v263 = vunpack.c.l.b16 %v192
    %v264 = vunpack.c.l.b16 %v193
    %v265 = vunpack.c.l.b16 %v194
    %v266 = vunpack.c.l.b16 %v195
    %v267 = vunpack.c.l.b16 %v196
    %v268 = vunpack.c.l.b16 %v197
    %v269 = vunpack.c.l.b16 %v198
    %v270 = vunpack.c.l.b16 %v199
    %v271 = vunpack.c.l.b16 %v200
    %v272 = vunpack.c.l.b16 %v201
    %v273 = vunpack.c.l.b16 %v202
    %v274 = vunpack.c.l.b16 %v203
    %v275 = vunpack.c.l.b16 %v204
    %v276 = vunpack.c.l.b16 %v205
    %v277 = vunpack.c.l.b16 %v206
    %v278 = vunpack.c.l.b16 %v207
    %v279 = vunpack.c.l.b16 %v208
    %v280 = vunpack.c.l.b16 %v209
    %v281 = vunpack.c.l.b16 %v210
    %v282 = vunpack.c.l.b16 %v211
    %v283 = vunpack.c.l.b16 %v212
    %v284 = vunpack.c.l.b16 %v213
    %v285 = vunpack.c.l.b16 %v214
    %v286 = vpack.c.b16 %v255, %v254
    %v287 = vpack.c.b16 %v257, %v256
    %v288 = vpack.c.b16 %v259, %v258
    %v289 = vpack.c.b16 %v261, %v260
    %v290 = vpack.c.b16 %v263, %v262
    %v291 = vpack.c.b16 %v265, %v264
    %v292 = vpack.c.b16 %v267, %v266
    %v293 = vpack.c.b16 %v269, %v268
    %v294 = vpack.c.b16 %v271, %v270
    %v295 = vpack.c.b16 %v273, %v272
    %v296 = vpack.c.b16 %v275, %v274
    %v297 = vpack.c.b16 %v277, %v276
    %v298 = vpack.c.b16 %v279, %v278
    %v299 = vpack.c.b16 %v281, %v280
    %v300 = vpack.c.b16 %v283, %v282
    %v301 = vpack.c.b16 %v285, %v284
    %318 = vmatprep.subr.bf16.mxu0 0
    %319 = vmatpush1.bf16.msra.mxu0 %v286
    %320 = vmatprep.subr.bf16.mxu0 0
    %321 = vmatpush1.bf16.msra.mxu0 %v287
    %322 = vmatprep.subr.bf16.mxu0 0
    %323 = vmatpush1.bf16.msra.mxu0 %v288
    %324 = vmatprep.subr.bf16.mxu0 0
    %325 = vmatpush1.bf16.msra.mxu0 %v289
    %326 = vmatprep.subr.bf16.mxu0 0
    %327 = vmatpush1.bf16.msra.mxu0 %v290
    %328 = vmatprep.subr.bf16.mxu0 0
    %329 = vmatpush1.bf16.msra.mxu0 %v291
    %330 = vmatprep.subr.bf16.mxu0 0
    %331 = vmatpush1.bf16.msra.mxu0 %v292
    %332 = vmatprep.subr.bf16.mxu0 0
    %333 = vmatpush1.bf16.msra.mxu0 %v293
    %334 = vmatprep.subr.bf16.mxu0 0
    %335 = vmatpush1.bf16.msra.mxu0 %v294
    %336 = vmatprep.subr.bf16.mxu0 0
    %337 = vmatpush1.bf16.msra.mxu0 %v295
    %338 = vmatprep.subr.bf16.mxu0 0
    %339 = vmatpush1.bf16.msra.mxu0 %v296
    %340 = vmatprep.subr.bf16.mxu0 0
    %341 = vmatpush1.bf16.msra.mxu0 %v297
    %342 = vmatprep.subr.bf16.mxu0 0
    %343 = vmatpush1.bf16.msra.mxu0 %v298
    %344 = vmatprep.subr.bf16.mxu0 0
    %345 = vmatpush1.bf16.msra.mxu0 %v299
    %346 = vmatprep.subr.bf16.mxu0 0
    %347 = vmatpush1.bf16.msra.mxu0 %v300
    %348 = vmatprep.subr.bf16.mxu0 0
    %349 = vmatpush1.bf16.msra.mxu0 %v301
    %350 = vmatprep.mubr.bf16.mxu0 %v182
    %351 = vmatmul.mubr.bf16.gmra.mrb[0].mxu0 %v181
    %v352 = vpop.f32.mrb[0].mxu0
    %v353 = vadd.f32 %v220, %v352
    %v354 = vpop.f32.mrb[0].mxu0
    %v355 = vpop.f32.mrb[0].mxu0
    %v356 = vadd.f32 %v220, %v355
    %v357 = vpop.f32.mrb[0].mxu0
    %358 = vdwg.mxu0
    %359 = vst [vmem:[#allocation8] sm:$0xff] %v353
    %360 = vst [vmem:[#allocation8 + $0x8] sm:$0xff] %v356
    // Predicated region
    $region34: #{tpu_custom_call.1} parent=1 // pred_check
      _
    $region35: #{tpu_custom_call.1} parent=1 // pred_check_branch
      %362 = sbr.rel (0) target = $region37
    $region36: #{tpu_custom_call.1} parent=1 // pred_region
      %s364 = ssub.s32 256, 256
      %365 = vsyncadd [#allocation4], %s364
      %s366 = sshll.u32 [#allocation8], 4
      %s367 = int_to_ptr.vmem [resolvable:$true] %s366
      %372 = dma.vmem_to_hbm [thread:$0]  %s367, 256, %s5, [#allocation4], 128, 128, 8
    $region37: #{tpu_custom_call.1} parent=1 // pred_fallthru
      _
    // Predicated region
    $region38: #{tpu_custom_call.1} parent=1 // pred_check
      _
    $region39: #{tpu_custom_call.1} parent=1 // pred_check_branch
      %374 = sbr.rel (0) target = $region41
    $region40: #{tpu_custom_call.1} parent=1 // pred_region
      %375 = dma.done [#allocation4], 256
    $region41: #{tpu_custom_call.1} parent=1 // pred_fallthru
      _
    %376 = vsyncpa [#allocation3], 1
    %377 = vsyncpa [#allocation6], 1
    %378 = vsyncpa [#allocation4], 1

</llo_original>
